<compile_context>
chip_gen: v7x
topology: tpu7x:2x2x1
jax: 0.10.0
libtpu: 0.0.40
codegen_flags: <defaults>
</compile_context>

<pallas_src>
import math

import jax
import jax.numpy as jnp
from jax.experimental import pallas as pl
from jax.experimental.pallas import tpu as pltpu

_EPS = 1e-12                      # torch.nn.functional.normalize default eps
_EPS_SQ = _EPS * _EPS             # 1e-24, still a normal f32

_DEFAULT_BLOCK_BYTES = 4 << 20    # per-block target, safe on every generation
_DEFAULT_VMEM_LIMIT = 32 << 20
_BIG_VMEM_BLOCK_BYTES = 8 << 20   # for 128 MiB-VMEM parts (v5e / v6e)
_BIG_VMEM_LIMIT = 64 << 20
_MIN_BLOCK_BYTES = 1 << 20        # never shrink a block below ~1 MiB
_MIN_GRID_STEPS = 8               # >= 3-4 blocks per TensorCore on v7x
_MAX_PACK_WIDTH = 1024            # cap on packed slab width W = lcm(D, 128)


# --------------------------------------------------------------------------
# Kernels
# --------------------------------------------------------------------------
def _l2n_rowwise_kernel(x_ref, o_ref):
    """Normalize each row of a [TR, D] tile over its last axis."""
    x = x_ref[...].astype(jnp.float32)
    ss = jnp.sum(x * x, axis=-1, keepdims=True)
    inv = jax.lax.rsqrt(jnp.maximum(ss, _EPS_SQ))   # == 1 / max(||x||, eps)
    o_ref[...] = (x * inv).astype(o_ref.dtype)


def _l2n_packed_small_kernel(x_ref, m_ref, o_ref):
    """W <= 256: one block-diagonal [W,W] MXU matmul reduces + broadcasts."""
    x = x_ref[...].astype(jnp.float32)
    ss = jnp.dot(x * x, m_ref[...], preferred_element_type=jnp.float32)
    inv = jax.lax.rsqrt(jnp.maximum(ss, _EPS_SQ))
    o_ref[...] = (x * inv).astype(o_ref.dtype)


def _l2n_packed_wide_kernel(x_ref, sel_ref, bc_ref, o_ref):
    """W >= 384: factorized reduce ([W,G]) -> rsqrt on [TR,G] -> broadcast ([G,W]).

    Cuts MXU tile passes from (W/128)^2 to 2*(W/128) and rsqrt count by D
    compared with the single block-diagonal matmul.
    """
    x = x_ref[...].astype(jnp.float32)
    ss_g = jnp.dot(x * x, sel_ref[...], preferred_element_type=jnp.float32)
    inv_g = jax.lax.rsqrt(jnp.maximum(ss_g, _EPS_SQ))
    inv = jnp.dot(inv_g, bc_ref[...], preferred_element_type=jnp.float32)
    o_ref[...] = (x * inv).astype(o_ref.dtype)


# --------------------------------------------------------------------------
# Sizing helpers
# --------------------------------------------------------------------------
def _chip_budgets():
    """(target_block_bytes, vmem_limit_bytes) chosen per TPU generation."""
    block, limit = _DEFAULT_BLOCK_BYTES, _DEFAULT_VMEM_LIMIT
    try:  # best-effort generation query; fall back to v7x-safe defaults
        info = pltpu.get_tpu_info()
        vmem_phys = getattr(info, "vmem_capacity_bytes", None)
        if vmem_phys is not None and vmem_phys >= (96 << 20):
            # 128 MiB physical VMEM (v5e / v6e): bigger blocks, higher limit.
            block, limit = _BIG_VMEM_BLOCK_BYTES, _BIG_VMEM_LIMIT
    except Exception:
        pass
    return block, limit


def _sublane_multiple(dtype) -> int:
    # f32 -> 8, bf16/f16 -> 16, int8/fp8 -> 32 (sub-32-bit packs along sublanes)
    return max(8, 32 // jnp.dtype(dtype).itemsize)


def _pick_row_tile(n_rows: int, row_bytes: int, sublane: int,
                   block_bytes: int) -> int:
    if n_rows <= sublane:
        return max(n_rows, 1)          # full extent; allowed even if < 8

    def floor_s(v):
        return (v // sublane) * sublane

    # Tile from the per-block VMEM budget.
    tile = max(sublane, floor_s(block_bytes // max(row_bytes, 1)))
    # Aim for >= _MIN_GRID_STEPS grid steps so both v7x TensorCores get 3-4
    # blocks each and the double-buffer pipeline overlaps ...
    min_rows = max(sublane, floor_s(_MIN_BLOCK_BYTES // max(row_bytes, 1)))
    step_cap = floor_s(n_rows // _MIN_GRID_STEPS)
    if step_cap >= sublane:
        tile = min(tile, max(step_cap, min_rows))   # ... but keep blocks >= ~1 MiB
    else:
        # Not enough rows for that many steps: at least give both TCs work.
        two_cap = floor_s(n_rows - 1)
        if two_cap >= sublane:
            tile = min(tile, two_cap)
    return n_rows if tile >= n_rows else tile


def _vmem_limit_for(base: int, row_tile: int, width: int, itemsize: int,
                    mask_bytes: int) -> int:
    # in+out blocks double-buffered + resident mask buffers + slack for f32
    # intermediates.  Guards against very wide rows collapsing to an 8-row
    # tile that would otherwise blow the scoped default.
    # TODO(synk): for huge D split the last dim over a second "arbitrary" grid
    # axis (two-pass accumulate + scale) instead of only raising the limit.
    needed = 4 * row_tile * width * itemsize + 2 * mask_bytes + (8 << 20)
    return int(max(base, needed))


def _compiler_params(vmem_limit: int):
    return pltpu.CompilerParams(
        dimension_semantics=("parallel",),
        vmem_limit_bytes=int(vmem_limit),
    )


# --------------------------------------------------------------------------
# pallas_call wrappers
# --------------------------------------------------------------------------
def _run_rowwise(x2d: jax.Array, block_bytes: int, base_vmem: int) -> jax.Array:
    rows, d = x2d.shape
    sublane = _sublane_multiple(x2d.dtype)
    itemsize = jnp.dtype(x2d.dtype).itemsize
    row_tile = _pick_row_tile(rows, d * itemsize, sublane, block_bytes)
    vmem_limit = _vmem_limit_for(base_vmem, row_tile, d, itemsize, 0)
    return pl.pallas_call(
        _l2n_rowwise_kernel,
        out_shape=jax.ShapeDtypeStruct((rows, d), x2d.dtype),
        grid_spec=pltpu.PrefetchScalarGridSpec(
            num_scalar_prefetch=0,
            grid=(pl.cdiv(rows, row_tile),),
            in_specs=[pl.BlockSpec((row_tile, d), lambda i: (i, 0))],
            out_specs=pl.BlockSpec((row_tile, d), lambda i: (i, 0)),
        ),
        compiler_params=_compiler_params(vmem_limit),
    )(x2d)


def _run_packed(xp: jax.Array, d: int, block_bytes: int,
                base_vmem: int) -> jax.Array:
    n_rows, w = xp.shape
    g = w // d                           # logical rows folded per slab row
    sublane = _sublane_multiple(xp.dtype)
    itemsize = jnp.dtype(xp.dtype).itemsize
    row_tile = _pick_row_tile(n_rows, w * itemsize, sublane, block_bytes)

    if w <= 256:
        # Single block-diagonal [W,W] ones matrix: one MXU tile pass per slab.
        li = jax.lax.broadcasted_iota(jnp.int32, (w, w), 0) // d
        lj = jax.lax.broadcasted_iota(jnp.int32, (w, w), 1) // d
        mask = (li == lj).astype(jnp.float32)
        kernel = _l2n_packed_small_kernel
        mask_args = (mask,)
        mask_specs = [pl.BlockSpec((w, w), lambda i: (0, 0))]
        mask_bytes = mask.size * 4
    else:
        # Factorized reduce/broadcast selectors: [W,G] and its transpose [G,W].
        grp = jax.lax.broadcasted_iota(jnp.int32, (w, g), 0) // d
        col = jax.lax.broadcasted_iota(jnp.int32, (w, g), 1)
        sel = (grp == col).astype(jnp.float32)     # [W, G]
        bc = sel.T                                  # [G, W]
        kernel = _l2n_packed_wide_kernel
        mask_args = (sel, bc)
        mask_specs = [pl.BlockSpec((w, g), lambda i: (0, 0)),
                      pl.BlockSpec((g, w), lambda i: (0, 0))]
        mask_bytes = (sel.size + bc.size) * 4

    vmem_limit = _vmem_limit_for(base_vmem, row_tile, w, itemsize, mask_bytes)
    return pl.pallas_call(
        kernel,
        out_shape=jax.ShapeDtypeStruct((n_rows, w), xp.dtype),
        grid_spec=pltpu.PrefetchScalarGridSpec(
            num_scalar_prefetch=0,
            grid=(pl.cdiv(n_rows, row_tile),),
            in_specs=[pl.BlockSpec((row_tile, w), lambda i: (i, 0))] + mask_specs,
            out_specs=pl.BlockSpec((row_tile, w), lambda i: (i, 0)),
        ),
        compiler_params=_compiler_params(vmem_limit),
    )(xp, *mask_args)


# --------------------------------------------------------------------------
# Public entry point (matches F.normalize(x, dim=-1))
# --------------------------------------------------------------------------
def normalize(x: jax.Array) -> jax.Array:
    """L2-normalize along the last axis; matches F.normalize(x, dim=-1)."""
    orig_shape = x.shape
    d = orig_shape[-1]
    rows = int(math.prod(orig_shape[:-1]))
    if rows == 0 or d == 0:
        return x                         # nothing to normalize

    x2d = x.reshape(rows, d)             # free: row-major collapse of leading dims
    block_bytes, base_vmem = _chip_budgets()

    # Lane-dense packing: fold G rows into a slab row of width W = lcm(D, 128)
    # whenever D itself is not lane-aligned and at least one full slab exists.
    if d % 128 != 0:
        g = 128 // math.gcd(d, 128)
        w = g * d
        if w <= _MAX_PACK_WIDTH and rows >= g:
            n_full = rows // g
            main_rows = n_full * g
            xp = (x2d if main_rows == rows else x2d[:main_rows]).reshape(n_full, w)
            main = _run_packed(xp, d, block_bytes, base_vmem).reshape(main_rows, d)
            if main_rows == rows:
                return main.reshape(orig_shape)
            # < G leftover rows: tiny lane-sparse cleanup call, then stitch.
            tail = _run_rowwise(x2d[main_rows:], block_bytes, base_vmem)
            return jnp.concatenate([main, tail], axis=0).reshape(orig_shape)

    # Direct per-row path: lane-dense when D % 128 == 0 (or D large); correct
    # (masked stores) for the remaining odd-D shapes.
    return _run_rowwise(x2d, block_bytes, base_vmem).reshape(orig_shape)


def _reference(x):
    nrm = jnp.sqrt(jnp.sum(x.astype(jnp.float32) ** 2, axis=-1, keepdims=True))
    return (x.astype(jnp.float32) / jnp.maximum(nrm, _EPS)).astype(x.dtype)


if __name__ == "__main__":
    key = jax.random.PRNGKey(0)

    # Primary case: last dim 16 -> packed lane-dense path (W = 128, 1 MXU pass).
    x = jax.random.normal(key, (2, 4, 16, 16), dtype=jnp.float32)
    out = jax.block_until_ready(normalize(x))
    assert out.shape == x.shape and out.dtype == x.dtype
    assert jnp.allclose(out, _reference(x), atol=1e-5, rtol=1e-5)

    # Lane-aligned case: last dim 128 -> direct per-row path.
    x2 = jax.random.normal(jax.random.PRNGKey(0), (4, 8, 128), dtype=jnp.float32)
    out2 = jax.block_until_ready(normalize(x2))
    assert jnp.allclose(out2, _reference(x2), atol=1e-5, rtol=1e-5)

    # Direction vectors (nerfstudio): last dim 3 -> packed factorized path (W=384).
    x3 = jax.random.normal(jax.random.PRNGKey(0), (4, 256, 3), dtype=jnp.float32)
    out3 = jax.block_until_ready(normalize(x3))
    assert jnp.allclose(out3, _reference(x3), atol=1e-5, rtol=1e-5)

    # Ragged row count (rows % G != 0): packed bulk + rowwise tail + stitch.
    x4 = jax.random.normal(jax.random.PRNGKey(0), (100, 16), dtype=jnp.float32)
    out4 = jax.block_until_ready(normalize(x4))
    assert jnp.allclose(out4, _reference(x4), atol=1e-5, rtol=1e-5)

    print("KERNEL_OK")
</pallas_src>

<mosaic_0001>
module attributes {stable_mosaic.version = 11 : i64} {
  func.func @_l2n_packed_small_kernel(%arg0: i32, %arg1: memref<8x128xf32, #tpu.memory_space<vmem>>, %arg2: memref<128x128xf32, #tpu.memory_space<vmem>>, %arg3: memref<8x128xf32, #tpu.memory_space<vmem>>) attributes {dimension_semantics = [#tpu.dimension_semantics<parallel>], iteration_bounds = array<i64: 2>, scalar_prefetch = 0 : i64, scratch_operands = 0 : i64, tpu.core_type = #tpu.core_type<tc>, window_params = [{transform_indices = @transform_0, window_bounds = array<i64: 8, 128>}, {pipeline_mode = #tpu.pipeline_mode<synchronous>, transform_indices = @transform_1, window_bounds = array<i64: 128, 128>}, {transform_indices = @transform_2, window_bounds = array<i64: 8, 128>}]} {
    %c0 = arith.constant 0 : index
    %c0_0 = arith.constant 0 : index
    %0 = vector.load %arg1[%c0, %c0_0] : memref<8x128xf32, #tpu.memory_space<vmem>>, vector<8x128xf32>
    %1 = arith.mulf %0, %0 : vector<8x128xf32>
    %c0_1 = arith.constant 0 : index
    %c0_2 = arith.constant 0 : index
    %2 = vector.load %arg2[%c0_1, %c0_2] : memref<128x128xf32, #tpu.memory_space<vmem>>, vector<128x128xf32>
    %cst = arith.constant dense<0.000000e+00> : vector<8x128xf32>
    %3 = tpu.matmul %1, %2, %cst {dimension_numbers = #tpu.dot_dimension_numbers<[1], [0], [0], [1], [0, 0, 1, 1], [], []>} : vector<8x128xf32>, vector<128x128xf32>, vector<8x128xf32> -> vector<8x128xf32>
    %cst_3 = arith.constant 1.000000e-24 : f32
    %4 = vector.broadcast %cst_3 : f32 to vector<8x128xf32>
    %5 = arith.maximumf %3, %4 : vector<8x128xf32>
    %6 = math.rsqrt %5 : vector<8x128xf32>
    %7 = arith.mulf %0, %6 : vector<8x128xf32>
    %c0_4 = arith.constant 0 : index
    %c0_5 = arith.constant 0 : index
    %8 = vector.load %arg3[%c0_4, %c0_5] : memref<8x128xf32, #tpu.memory_space<vmem>>, vector<8x128xf32>
    tpu.vector_store %arg3[%c0_4, %c0_5], %7 {strides = array<i32>} : memref<8x128xf32, #tpu.memory_space<vmem>>, vector<8x128xf32>,
    return
  }
  func.func @transform_0(%arg0: i32) -> (i32, i32) {
    %c0_i32 = arith.constant 0 : i32
    %c0_i32_0 = arith.constant 0 : i32
    return %arg0, %c0_i32 : i32, i32
  }
  func.func @transform_1(%arg0: i32) -> (i32, i32) {
    %c0_i32 = arith.constant 0 : i32
    %c0_i32_0 = arith.constant 0 : i32
    %c0_i32_1 = arith.constant 0 : i32
    return %c0_i32, %c0_i32_0 : i32, i32
  }
  func.func @transform_2(%arg0: i32) -> (i32, i32) {
    %c0_i32 = arith.constant 0 : i32
    %c0_i32_0 = arith.constant 0 : i32
    return %arg0, %c0_i32 : i32, i32
  }
}

</mosaic_0001>

<llo_original>
// kernel: tpu_custom_call.1
$region0: #{tpu_custom_call.1}
  #allocation0 [shape = 'u32[]', space=smem, size = 0x4, offset = 0x4, fixed_abs, tag = 'smem constant byte address 0x4 - core index']
  #allocation1 [shape = 'u32[144,128]{1,0:T(1,128)}', space=vmem, size = 0x12000, scoped, tag = 'internal scratch']
  %s0 = inlined_call_operand.hbm [shape: f32[16,128], index: 0, kind: input, shape index: {}]
  %s1 = inlined_call_operand.hbm [shape: f32[128,128], index: 1, kind: input, shape index: {}]
  %s2 = inlined_call_operand.hbm [shape: f32[16,128], index: 2, kind: output, shape index: {}]
  %s3 = sld [smem:[#allocation0]]
  $region49: #{tpu_custom_call.1} parent=0
    _
  %s5 = ssub.s32 1, %s3
  %s6 = scalar_select 0, %s5, %s3
  $region1: #{tpu_custom_call.1} parent=0
    #allocation2 [shape = 'u8[8192]{0}', space=vmem, size = 0x2000, scoped, tag = 'input window, operand 0']
    #allocation3 [shape = 's32[2]{0}', space=sflag, size = 0x8, scoped, tag = 'scoped memory for tpu_custom_call.1']
    #allocation4 [shape = 's32[2]{0}', space=sflag, size = 0x8, scoped, tag = 'scoped memory for tpu_custom_call.1']
    #allocation5 [shape = 'u8[65536]{0}', space=vmem, size = 0x10000, scoped, tag = 'input window, operand 1, single buffered']
    #allocation6 [shape = 's32[1]{0}', space=sflag, size = 0x4, scoped, tag = 'scoped memory for tpu_custom_call.1']
    #allocation7 [shape = 'u8[8192]{0}', space=vmem, size = 0x2000, scoped, tag = 'output window, operand 0']
    %7 = vsyncpa [#allocation3], 0
    %s8 = scalar_lea.sflag [#allocation3], 1
    %9 = vsyncpa %s8, 0
    %10 = vsyncpa [#allocation6], 0
    %11 = vsyncpa [#allocation4], 0
    %s12 = scalar_lea.sflag [#allocation4], 1
    %13 = vsyncpa %s12, 0
    loop: start=0, step=1, limit=4
    $region2: #{tpu_custom_call.1} parent=1 // loop_pre_header
      _
    $region3: #{tpu_custom_call.1} parent=1 // loop_header
      %s15 = sphi 0, %s19
      %p16 = scmp.ge.s32.totalorder %s15, 4
      %s25 = sphi 0, %s27
      %s28 = sphi 0, %s25
      %s29 = sphi 0, %s28
      %s45 = sphi 0, %s29
      %s49 = sphi 0, %s49
      %s51 = sphi 0, %s49
      %s52 = sphi 0, %s51
      %s66 = sphi 0, %s52
      %s72 = sphi 0, %s74
      %s75 = sphi 0, %s72
      %s76 = sphi 0, %s75
      %s92 = sphi 0, %s76
    $region4: #{tpu_custom_call.1} parent=1 // loop_header_branch
      %18 = sbr.rel (%p16) target = $region8
    $region5: #{tpu_custom_call.1} parent=1 // loop_body
      %s20 = ssub.s32 %s15, 1
      %s21 = ssub.s32 %s15, 2
      %s22 = sadd.s32 %s15, 1
      %s23 = ssub.s32 %s15, %s22
      %p24 = scmp.eq.s32.totalorder %s23, 0
      %s26 = sadd.s32 %s25, 1
      %s27 = scalar_select %p24, %s25, %s26
      %p30 = pneg %p24
      %p31 = scmp.eq.s32.totalorder %s15, 1
      %p32 = por %p30, %p31
      %p33 = scmp.ne.s32.totalorder %s25, %s28
      %p34 = scmp.eq.s32.totalorder %s15, 0
      %p35 = por %p33, %p34
      %p36 = scmp.ne.s32.totalorder %s25, %s28
      %p37 = scmp.eq.s32.totalorder %s20, 1
      %p38 = por %p36, %p37
      %p39 = scmp.ne.s32.totalorder %s28, %s29
      %p40 = scmp.eq.s32.totalorder %s20, 0
      %p41 = por %p39, %p40
      %p42 = scmp.ne.s32.totalorder %s28, %s29
      %p43 = scmp.eq.s32.totalorder %s21, 1
      %p44 = por %p42, %p43
      %p46 = scmp.ne.s32.totalorder %s29, %s45
      %p47 = scmp.eq.s32.totalorder %s21, 0
      %p48 = por %p46, %p47
      %s50 = sadd.s32 %s49, 1
      %p53 = scmp.eq.s32.totalorder %s15, 1
      %p54 = scmp.ne.s32.totalorder %s49, %s51
      %p55 = scmp.eq.s32.totalorder %s15, 0
      %p56 = por %p54, %p55
      %p57 = scmp.ne.s32.totalorder %s49, %s51
      %p58 = scmp.eq.s32.totalorder %s20, 1
      %p59 = por %p57, %p58
      %p60 = scmp.ne.s32.totalorder %s51, %s52
      %p61 = scmp.eq.s32.totalorder %s20, 0
      %p62 = por %p60, %p61
      %p63 = scmp.ne.s32.totalorder %s51, %s52
      %p64 = scmp.eq.s32.totalorder %s21, 1
      %p65 = por %p63, %p64
      %p67 = scmp.ne.s32.totalorder %s52, %s66
      %p68 = scmp.eq.s32.totalorder %s21, 0
      %p69 = por %p67, %p68
      %s70 = ssub.s32 %s15, %s22
      %p71 = scmp.eq.s32.totalorder %s70, 0
      %s73 = sadd.s32 %s72, 1
      %s74 = scalar_select %p71, %s72, %s73
      %p77 = pneg %p71
      %p78 = scmp.eq.s32.totalorder %s15, 1
      %p79 = por %p77, %p78
      %p80 = scmp.ne.s32.totalorder %s72, %s75
      %p81 = scmp.eq.s32.totalorder %s15, 0
      %p82 = por %p80, %p81
      %p83 = scmp.ne.s32.totalorder %s72, %s75
      %p84 = scmp.eq.s32.totalorder %s20, 1
      %p85 = por %p83, %p84
      %p86 = scmp.ne.s32.totalorder %s75, %s76
      %p87 = scmp.eq.s32.totalorder %s20, 0
      %p88 = por %p86, %p87
      %p89 = scmp.ne.s32.totalorder %s75, %s76
      %p90 = scmp.eq.s32.totalorder %s21, 1
      %p91 = por %p89, %p90
      %p93 = scmp.ne.s32.totalorder %s76, %s92
      %p94 = scmp.eq.s32.totalorder %s21, 0
      %p95 = por %p93, %p94
      %p96 = scmp.le.s32.totalorder 1, %s15
      %p97 = scmp.lt.s32.totalorder %s15, 3
      %p98 = pnand %p96, %p97
      %p99 = pneg %p98
      // Predicated region
      $region9: #{tpu_custom_call.1} parent=5 // pred_check
        _
      $region10: #{tpu_custom_call.1} parent=5 // pred_check_branch
        %101 = sbr.rel (%p98) target = $region12
      $region11: #{tpu_custom_call.1} parent=5 // pred_region
        %s102 = ssub.s32 %s15, 1
        // Predicated region
        $region13: #{tpu_custom_call.1} parent=11 // pred_check
          %p103 = pneg %p62
        $region14: #{tpu_custom_call.1} parent=11 // pred_check_branch
          %105 = sbr.rel (%p103) target = $region16
        $region15: #{tpu_custom_call.1} parent=11 // pred_region
          %s107 = ssub.s32 2048, 2048
          %108 = vsyncadd [#allocation6], %s107
          %s109 = sshll.u32 [#allocation5], 4
          %s110 = int_to_ptr.vmem [resolvable:$true] %s109
          %115 = dma.hbm_to_vmem [thread:$0]  %s1, 2048, %s110, [#allocation6], 128, 128, 8
        $region16: #{tpu_custom_call.1} parent=11 // pred_fallthru
          _
      $region12: #{tpu_custom_call.1} parent=5 // pred_fallthru
        _
      %p116 = scmp.lt.s32.totalorder %s15, 2
      // Predicated region
      $region17: #{tpu_custom_call.1} parent=5 // pred_check
        %p117 = pneg %p116
      $region18: #{tpu_custom_call.1} parent=5 // pred_check_branch
        %119 = sbr.rel (%p117) target = $region20
      $region19: #{tpu_custom_call.1} parent=5 // pred_region
        // Predicated region
        $region21: #{tpu_custom_call.1} parent=19 // pred_check
          %p120 = pneg %p35
        $region22: #{tpu_custom_call.1} parent=19 // pred_check_branch
          %122 = sbr.rel (%p120) target = $region24
        $region23: #{tpu_custom_call.1} parent=19 // pred_region
          %s123 = sand.u32 %s25, 1
          %s124 = scalar_lea.sflag [#allocation3], %s123
          %s125 = sand.u32 %s25, 1
          %s126 = smul.addr %s125, 8
          %s127 = scalar_lea.vmem [#allocation2], %s126
          %s129 = ssub.s32 128, 128
          %130 = vsyncadd %s124, %s129
          %s131 = smul.addr %s15, 128
          %s132 = scalar_lea.hbm %s0, %s131
          %s134 = sshll.u32 %s127, 4
          %s135 = int_to_ptr.vmem [resolvable:$true] %s134
          %137 = dma.hbm_to_vmem [thread:$0]  %s132, 128, %s135, %s124
        $region24: #{tpu_custom_call.1} parent=19 // pred_fallthru
          _
      $region20: #{tpu_custom_call.1} parent=5 // pred_fallthru
        _
      %p138 = scmp.le.s32.totalorder 1, %s15
      %p139 = scmp.lt.s32.totalorder %s15, 3
      %p140 = pnand %p138, %p139
      %p141 = pneg %p140
      // Predicated region
      $region25: #{tpu_custom_call.1} parent=5 // pred_check
        _
      $region26: #{tpu_custom_call.1} parent=5 // pred_check_branch
        %143 = sbr.rel (%p140) target = $region28
      $region27: #{tpu_custom_call.1} parent=5 // pred_region
        %s144 = ssub.s32 %s15, 1
        %s145 = sand.u32 %s28, 1
        %s146 = scalar_lea.sflag [#allocation3], %s145
        %s147 = sand.u32 %s28, 1
        %s148 = smul.addr %s147, 8
        %s149 = scalar_lea.vmem [#allocation2], %s148
        // Predicated region
        $region29: #{tpu_custom_call.1} parent=27 // pred_check
          %p150 = pneg %p41
        $region30: #{tpu_custom_call.1} parent=27 // pred_check_branch
          %152 = sbr.rel (%p150) target = $region32
        $region31: #{tpu_custom_call.1} parent=27 // pred_region
          %153 = dma.done %s146, 128
        $region32: #{tpu_custom_call.1} parent=27 // pred_fallthru
          _
        // Predicated region
        $region33: #{tpu_custom_call.1} parent=27 // pred_check
          %p154 = pneg %p62
        $region34: #{tpu_custom_call.1} parent=27 // pred_check_branch
          %156 = sbr.rel (%p154) target = $region36
        $region35: #{tpu_custom_call.1} parent=27 // pred_region
          %157 = dma.done [#allocation6], 2048
        $region36: #{tpu_custom_call.1} parent=27 // pred_fallthru
          _
        %s158 = sand.u32 %s28, 1
        %s159 = scalar_lea.sflag [#allocation3], %s158
        %s160 = sand.u32 %s28, 1
        %s161 = smul.addr %s160, 8
        %s162 = scalar_lea.vmem [#allocation2], %s161
        %p163 = pneg %p41
        %p164 = pneg %p38
        %p165 = pneg %p62
        %p166 = pneg %p59
        %p167 = pneg %p88
        %p168 = pneg %p85
        %s169 = sand.u32 %s75, 1
        %s170 = scalar_lea.sflag [#allocation4], %s169
        %s171 = sand.u32 %s75, 1
        %s172 = smul.addr %s171, 8
        %s173 = scalar_lea.vmem [#allocation7], %s172
        %v174 = vld [vmem:[%s149] sm:$0xff]
        %v175 = vmul.f32 %v174, %v174
        %v176 = vld [vmem:[#allocation5] sm:$0xff]
        %v177 = vld [vmem:[#allocation5 + $0x8] sm:$0xff]
        %v178 = vld [vmem:[#allocation5 + $0x10] sm:$0xff]
        %v179 = vld [vmem:[#allocation5 + $0x18] sm:$0xff]
        %v180 = vld [vmem:[#allocation5 + $0x20] sm:$0xff]
        %v181 = vld [vmem:[#allocation5 + $0x28] sm:$0xff]
        %v182 = vld [vmem:[#allocation5 + $0x30] sm:$0xff]
        %v183 = vld [vmem:[#allocation5 + $0x38] sm:$0xff]
        %v184 = vld [vmem:[#allocation5 + $0x40] sm:$0xff]
        %v185 = vld [vmem:[#allocation5 + $0x48] sm:$0xff]
        %v186 = vld [vmem:[#allocation5 + $0x50] sm:$0xff]
        %v187 = vld [vmem:[#allocation5 + $0x58] sm:$0xff]
        %v188 = vld [vmem:[#allocation5 + $0x60] sm:$0xff]
        %v189 = vld [vmem:[#allocation5 + $0x68] sm:$0xff]
        %v190 = vld [vmem:[#allocation5 + $0x70] sm:$0xff]
        %v191 = vld [vmem:[#allocation5 + $0x78] sm:$0xff]
        %192 = vmatprep.subr.mxu0 0.0
        %193 = vmatpush1.msra.mxu0 %v176
        %194 = vmatprep.subr.mxu0 0.0
        %195 = vmatpush1.msra.mxu0 %v177
        %196 = vmatprep.subr.mxu0 0.0
        %197 = vmatpush1.msra.mxu0 %v178
        %198 = vmatprep.subr.mxu0 0.0
        %199 = vmatpush1.msra.mxu0 %v179
        %200 = vmatprep.subr.mxu0 0.0
        %201 = vmatpush1.msra.mxu0 %v180
        %202 = vmatprep.subr.mxu0 0.0
        %203 = vmatpush1.msra.mxu0 %v181
        %204 = vmatprep.subr.mxu0 0.0
        %205 = vmatpush1.msra.mxu0 %v182
        %206 = vmatprep.subr.mxu0 0.0
        %207 = vmatpush1.msra.mxu0 %v183
        %208 = vmatprep.subr.mxu0 0.0
        %209 = vmatpush1.msra.mxu0 %v184
        %210 = vmatprep.subr.mxu0 0.0
        %211 = vmatpush1.msra.mxu0 %v185
        %212 = vmatprep.subr.mxu0 0.0
        %213 = vmatpush1.msra.mxu0 %v186
        %214 = vmatprep.subr.mxu0 0.0
        %215 = vmatpush1.msra.mxu0 %v187
        %216 = vmatprep.subr.mxu0 0.0
        %217 = vmatpush1.msra.mxu0 %v188
        %218 = vmatprep.subr.mxu0 0.0
        %219 = vmatpush1.msra.mxu0 %v189
        %220 = vmatprep.subr.mxu0 0.0
        %221 = vmatpush1.msra.mxu0 %v190
        %222 = vmatprep.subr.mxu0 0.0
        %223 = vmatpush1.msra.mxu0 %v191
        %224 = vmatprep.subr.mxu0 0.0
        %225 = vmatpush1.msra.mxu0 0.0
        %226 = vmatprep.subr.mxu0 0.0
        %227 = vmatpush1.msra.mxu0 0.0
        %228 = vmatprep.subr.mxu0 0.0
        %229 = vmatpush1.msra.mxu0 0.0
        %230 = vmatprep.subr.mxu0 0.0
        %231 = vmatpush1.msra.mxu0 0.0
        %232 = vmatprep.subr.mxu0 0.0
        %233 = vmatpush1.msra.mxu0 0.0
        %234 = vmatprep.subr.mxu0 0.0
        %235 = vmatpush1.msra.mxu0 0.0
        %236 = vmatprep.subr.mxu0 0.0
        %237 = vmatpush1.msra.mxu0 0.0
        %238 = vmatprep.subr.mxu0 0.0
        %239 = vmatpush1.msra.mxu0 0.0
        %240 = vmatprep.subr.mxu0 0.0
        %241 = vmatpush1.msra.mxu0 0.0
        %242 = vmatprep.subr.mxu0 0.0
        %243 = vmatpush1.msra.mxu0 0.0
        %244 = vmatprep.subr.mxu0 0.0
        %245 = vmatpush1.msra.mxu0 0.0
        %246 = vmatprep.subr.mxu0 0.0
        %247 = vmatpush1.msra.mxu0 0.0
        %248 = vmatprep.subr.mxu0 0.0
        %249 = vmatpush1.msra.mxu0 0.0
        %250 = vmatprep.subr.mxu0 0.0
        %251 = vmatpush1.msra.mxu0 0.0
        %252 = vmatprep.subr.mxu0 0.0
        %253 = vmatpush1.msra.mxu0 0.0
        %254 = vmatprep.subr.mxu0 0.0
        %255 = vmatpush1.msra.mxu0 0.0
        %256 = vmatprep.mubr.f32.mxu0 0.0
        %257 = vmatmul.mubr.f32.gmra.mrb[0].mxu0 %v175
        %v258 = vpop.f32.mrb[0].mxu0
        %v259 = vadd.f32 0.0, %v258
        %v260 = vpop.f32.mrb[0].mxu0
        %261 = vdwg.mxu0
        %v262 = vmax.f32 %v259, 1e-24
        %v263 = vrsqrt.pop %v262
        %v264 = vmul.f32 %v174, %v263
        %265 = vst [vmem:[%s173] sm:$0xff] %v264
        %s266 = sand.u32 %s75, 1
        %s267 = scalar_lea.sflag [#allocation4], %s266
        %s268 = sand.u32 %s75, 1
        %s269 = smul.addr %s268, 8
        %s270 = scalar_lea.vmem [#allocation7], %s269
        // Predicated region
        $region37: #{tpu_custom_call.1} parent=27 // pred_check
          %p271 = pneg %p85
        $region38: #{tpu_custom_call.1} parent=27 // pred_check_branch
          %273 = sbr.rel (%p271) target = $region40
        $region39: #{tpu_custom_call.1} parent=27 // pred_region
          %s275 = ssub.s32 128, 128
          %276 = vsyncadd %s267, %s275
          %s277 = smul.addr %s20, 128
          %s278 = scalar_lea.hbm %s2, %s277
          %s280 = sshll.u32 %s270, 4
          %s281 = int_to_ptr.vmem [resolvable:$true] %s280
          %283 = dma.vmem_to_hbm [thread:$0]  %s281, 128, %s278, %s267
        $region40: #{tpu_custom_call.1} parent=27 // pred_fallthru
          _
      $region28: #{tpu_custom_call.1} parent=5 // pred_fallthru
        _
      %p284 = scmp.le.s32.totalorder 2, %s15
      // Predicated region
      $region41: #{tpu_custom_call.1} parent=5 // pred_check
        %p285 = pneg %p284
      $region42: #{tpu_custom_call.1} parent=5 // pred_check_branch
        %287 = sbr.rel (%p285) target = $region44
      $region43: #{tpu_custom_call.1} parent=5 // pred_region
        %s288 = ssub.s32 %s15, 2
        // Predicated region
        $region45: #{tpu_custom_call.1} parent=43 // pred_check
          %p289 = pneg %p91
        $region46: #{tpu_custom_call.1} parent=43 // pred_check_branch
          %291 = sbr.rel (%p289) target = $region48
        $region47: #{tpu_custom_call.1} parent=43 // pred_region
          %s292 = sand.u32 %s76, 1
          %s293 = scalar_lea.sflag [#allocation4], %s292
          %s294 = sand.u32 %s76, 1
          %s295 = smul.addr %s294, 8
          %s296 = scalar_lea.vmem [#allocation7], %s295
          %297 = dma.done %s293, 128
        $region48: #{tpu_custom_call.1} parent=43 // pred_fallthru
          _
      $region44: #{tpu_custom_call.1} parent=5 // pred_fallthru
        _
    $region6: #{tpu_custom_call.1} parent=1 // loop_footer
      %s19 = sadd.s32 1, %s15
    $region7: #{tpu_custom_call.1} parent=1 // loop_footer_branch
      %14 = sbr.rel target = $region3
    $region8: #{tpu_custom_call.1} parent=1 // loop_exit
      _
    %298 = vsyncpa [#allocation3], 1
    %s299 = scalar_lea.sflag [#allocation3], 1
    %300 = vsyncpa %s299, 1
    %301 = vsyncpa [#allocation6], 1
    %302 = vsyncpa [#allocation4], 1
    %s303 = scalar_lea.sflag [#allocation4], 1
    %304 = vsyncpa %s303, 1

</llo_original>
